<compile_context>
chip_gen: v7x
topology: tpu7x:2x2x1
jax: 0.10.0
libtpu: 0.0.40
codegen_flags: <defaults>
</compile_context>

<pallas_src>
import jax
import jax.numpy as jnp
from jax.experimental import pallas as pl
from jax.experimental.pallas import tpu as pltpu

D_IN, D_HID, D_OUT = 51, 125, 50
PAD = 128            # lane-dense padded width for the hidden layers
MAX_TM = 1024        # max batch-tile rows per grid step


def _round_up(x, m):
    return (x + m - 1) // m * m


def curvature_kernel(alphas_ref,
                     z_ref,
                     w1_ref, b1_ref,
                     w2_ref, b2_ref,
                     w3_ref, b3_ref,
                     w4_ref, b4_ref,
                     o_ref):
    """One (tm, 51) activation tile -> (tm, 50) output tile.

    Weights stay VMEM-resident (constant block index).  MXU inputs are cast
    to the weight dtype (bf16 on the fast path); bias-add / PReLU / ReLU and
    the HBM streams stay f32.
    """
    dt = w1_ref.dtype
    z = z_ref[...]

    # Linear(51, 125)  (hidden cols zero-padded to 128 -> padded lanes stay 0)
    h = jnp.dot(z.astype(dt), w1_ref[...],
                preferred_element_type=jnp.float32) + b1_ref[...]

    # Linear(125, 125) + PReLU (scalar slope from SMEM)
    h = jnp.dot(h.astype(dt), w2_ref[...],
                preferred_element_type=jnp.float32) + b2_ref[...]
    h = jnp.where(h >= 0, h, alphas_ref[0] * h)

    # Linear(125, 125) + PReLU
    h = jnp.dot(h.astype(dt), w3_ref[...],
                preferred_element_type=jnp.float32) + b3_ref[...]
    h = jnp.where(h >= 0, h, alphas_ref[1] * h)

    # Linear(125, 50) + ReLU  (50-wide output -> masked stores, but 2.56x
    # fewer store bytes than a 128-wide slab; vst slot has plenty of slack)
    h = jnp.dot(h.astype(dt), w4_ref[...],
                preferred_element_type=jnp.float32) + b4_ref[...]
    o_ref[...] = jnp.maximum(h, 0.0)


def prepare_params(params, mxu_dtype=jnp.bfloat16):
    """One-time weight prep (outside the per-forward path).

    Weight layout is (in, out), i.e. already transposed relative to PyTorch's
    nn.Linear (out, in) storage; transpose when importing real checkpoints.
    Zero padding keeps the padded hidden/output columns exactly 0.
    """
    (w1, b1, w2, b2, a2, w3, b3, a3, w4, b4) = params

    def padw(w, rows, cols):
        w = w.astype(jnp.float32)
        w = jnp.pad(w, ((0, rows - w.shape[0]), (0, cols - w.shape[1])))
        return w.astype(mxu_dtype)

    def padb(b, cols):
        b = jnp.asarray(b, jnp.float32).reshape(1, -1)
        return jnp.pad(b, ((0, 0), (0, cols - b.shape[1])))

    w1p = padw(w1, D_IN, PAD)        # (51, 128)
    w2p = padw(w2, PAD, PAD)         # (128, 128)
    w3p = padw(w3, PAD, PAD)         # (128, 128)
    w4p = padw(w4, PAD, D_OUT)       # (128, 50)
    b1p = padb(b1, PAD)
    b2p = padb(b2, PAD)
    b3p = padb(b3, PAD)
    b4p = padb(b4, D_OUT)
    alphas = jnp.stack([jnp.asarray(a2, jnp.float32).reshape(()),
                        jnp.asarray(a3, jnp.float32).reshape(())])
    return (alphas, w1p, b1p, w2p, b2p, w3p, b3p, w4p, b4p)


def curvature_forward(z, prepared):
    """z: (batch, 51) float32-castable. Returns (batch, 50) float32."""
    (alphas, w1p, b1p, w2p, b2p, w3p, b3p, w4p, b4p) = prepared
    z = z.astype(jnp.float32)
    batch = z.shape[0]

    # Batch tile: as large as practical (this kernel is an HBM stream), but
    # capped so big batches give >= 2 grid steps (v7x has 2 TCs; "parallel"
    # shards grid steps across them).  Small batches round up to a sublane
    # multiple.
    tm = max(8, min(MAX_TM, _round_up(pl.cdiv(batch, 2), 8)))
    batch_p = _round_up(batch, tm)
    if batch_p != batch:
        z = jnp.pad(z, ((0, batch_p - batch), (0, 0)))

    grid = (batch_p // tm,)

    def resident(shape):
        # Same block index every step -> weights stay VMEM-resident.
        return pl.BlockSpec(shape, lambda i: (0, 0))

    flops = 2 * batch_p * (D_IN * D_HID + 2 * D_HID * D_HID + D_HID * D_OUT)
    bytes_accessed = (batch_p * (D_IN + D_OUT) * 4
                      + sum(int(a.size) * a.dtype.itemsize
                            for a in (w1p, w2p, w3p, w4p, b1p, b2p, b3p, b4p)))

    out = pl.pallas_call(
        curvature_kernel,
        out_shape=jax.ShapeDtypeStruct((batch_p, D_OUT), jnp.float32),
        grid=grid,
        in_specs=[
            pl.BlockSpec(memory_space=pltpu.MemorySpace.SMEM),   # PReLU slopes
            pl.BlockSpec((tm, D_IN), lambda i: (i, 0)),          # z tile (unpadded lanes)
            resident((D_IN, PAD)), resident((1, PAD)),           # w1, b1
            resident((PAD, PAD)), resident((1, PAD)),            # w2, b2
            resident((PAD, PAD)), resident((1, PAD)),            # w3, b3
            resident((PAD, D_OUT)), resident((1, D_OUT)),        # w4, b4
        ],
        out_specs=pl.BlockSpec((tm, D_OUT), lambda i: (i, 0)),
        compiler_params=pltpu.CompilerParams(
            dimension_semantics=("parallel",)),
        cost_estimate=pl.CostEstimate(flops=flops, transcendentals=0,
                                      bytes_accessed=bytes_accessed),
    )(alphas, z, w1p, b1p, w2p, b2p, w3p, b3p, w4p, b4p)

    return out[:batch] if batch_p != batch else out


def init_params(key, hidden_size=125):
    """Deterministic init mimicking PyTorch Linear default U(-1/sqrt(fan_in), +)."""
    def linear(key, fan_in, fan_out):
        kw, kb = jax.random.split(key)
        bound = 1.0 / jnp.sqrt(jnp.float32(fan_in))
        w = jax.random.uniform(kw, (fan_in, fan_out), jnp.float32, -bound, bound)
        b = jax.random.uniform(kb, (1, fan_out), jnp.float32, -bound, bound)
        return w, b

    k1, k2, k3, k4 = jax.random.split(key, 4)
    w1, b1 = linear(k1, D_IN, hidden_size)
    w2, b2 = linear(k2, hidden_size, hidden_size)
    w3, b3 = linear(k3, hidden_size, hidden_size)
    w4, b4 = linear(k4, hidden_size, D_OUT)
    # PyTorch PReLU default: single shared slope = 0.25
    a2 = jnp.full((1, 1), 0.25, jnp.float32)
    a3 = jnp.full((1, 1), 0.25, jnp.float32)
    return (w1, b1, w2, b2, a2, w3, b3, a3, w4, b4)


def reference_forward(z, params):
    (w1, b1, w2, b2, a2, w3, b3, a3, w4, b4) = params
    h = z.astype(jnp.float32) @ w1 + b1
    h = h @ w2 + b2
    h = jnp.where(h >= 0, h, a2[0, 0] * h)
    h = h @ w3 + b3
    h = jnp.where(h >= 0, h, a3[0, 0] * h)
    h = h @ w4 + b4
    return jnp.maximum(h, 0.0)


if __name__ == "__main__":
    key = jax.random.PRNGKey(0)
    kz1, kz2, kp = jax.random.split(key, 3)
    params = init_params(kp)

    z_small = jax.random.normal(kz1, (8, D_IN), jnp.float32)
    z_big = jax.random.normal(kz2, (320, D_IN), jnp.float32)

    # Exact path (f32 MXU inputs): must match the f32 reference tightly.
    prep_f32 = prepare_params(params, mxu_dtype=jnp.float32)

    out_small = jax.block_until_ready(curvature_forward(z_small, prep_f32))
    ref_small = reference_forward(z_small, params)
    assert out_small.shape == (8, D_OUT), out_small.shape
    assert jnp.allclose(out_small, ref_small, atol=1e-4, rtol=1e-4), \
        "small-batch f32 mismatch vs reference"

    out_big = jax.block_until_ready(curvature_forward(z_big, prep_f32))
    ref_big = reference_forward(z_big, params)
    assert out_big.shape == (320, D_OUT), out_big.shape
    assert jnp.allclose(out_big, ref_big, atol=1e-4, rtol=1e-4), \
        "large-batch f32 mismatch vs reference"

    # Fast path (bf16 MXU inputs, f32 accumulation/streaming): looser tolerance.
    prep_bf16 = prepare_params(params, mxu_dtype=jnp.bfloat16)
    out_fast = jax.block_until_ready(curvature_forward(z_big, prep_bf16))
    assert out_fast.shape == (320, D_OUT), out_fast.shape
    assert jnp.allclose(out_fast, ref_big, atol=5e-2, rtol=5e-2), \
        "large-batch bf16 mismatch vs reference"

    print("KERNEL_OK")
</pallas_src>

<mosaic_0001>
module attributes {stable_mosaic.version = 11 : i64} {
  func.func @curvature_kernel(%arg0: i32, %arg1: memref<2xf32, #tpu.memory_space<smem>>, %arg2: memref<8x51xf32, #tpu.memory_space<vmem>>, %arg3: memref<51x128xf32, #tpu.memory_space<vmem>>, %arg4: memref<1x128xf32, #tpu.memory_space<vmem>>, %arg5: memref<128x128xf32, #tpu.memory_space<vmem>>, %arg6: memref<1x128xf32, #tpu.memory_space<vmem>>, %arg7: memref<128x128xf32, #tpu.memory_space<vmem>>, %arg8: memref<1x128xf32, #tpu.memory_space<vmem>>, %arg9: memref<128x50xf32, #tpu.memory_space<vmem>>, %arg10: memref<1x50xf32, #tpu.memory_space<vmem>>, %arg11: memref<8x50xf32, #tpu.memory_space<vmem>>) attributes {dimension_semantics = [#tpu.dimension_semantics<parallel>], iteration_bounds = array<i64: 1>, scalar_prefetch = 0 : i64, scratch_operands = 0 : i64, tpu.core_type = #tpu.core_type<tc>, window_params = [{transform_indices = @transform_0, window_bounds = array<i64: 2>}, {transform_indices = @transform_1, window_bounds = array<i64: 8, 51>}, {pipeline_mode = #tpu.pipeline_mode<synchronous>, transform_indices = @transform_2, window_bounds = array<i64: 51, 128>}, {pipeline_mode = #tpu.pipeline_mode<synchronous>, transform_indices = @transform_3, window_bounds = array<i64: 1, 128>}, {pipeline_mode = #tpu.pipeline_mode<synchronous>, transform_indices = @transform_4, window_bounds = array<i64: 128, 128>}, {pipeline_mode = #tpu.pipeline_mode<synchronous>, transform_indices = @transform_5, window_bounds = array<i64: 1, 128>}, {pipeline_mode = #tpu.pipeline_mode<synchronous>, transform_indices = @transform_6, window_bounds = array<i64: 128, 128>}, {pipeline_mode = #tpu.pipeline_mode<synchronous>, transform_indices = @transform_7, window_bounds = array<i64: 1, 128>}, {pipeline_mode = #tpu.pipeline_mode<synchronous>, transform_indices = @transform_8, window_bounds = array<i64: 128, 50>}, {pipeline_mode = #tpu.pipeline_mode<synchronous>, transform_indices = @transform_9, window_bounds = array<i64: 1, 50>}, {transform_indices = @transform_10, window_bounds = array<i64: 8, 50>}]} {
    %c0 = arith.constant 0 : index
    %c0_0 = arith.constant 0 : index
    %0 = vector.load %arg2[%c0, %c0_0] : memref<8x51xf32, #tpu.memory_space<vmem>>, vector<8x51xf32>
    %c0_1 = arith.constant 0 : index
    %c0_2 = arith.constant 0 : index
    %1 = vector.load %arg3[%c0_1, %c0_2] : memref<51x128xf32, #tpu.memory_space<vmem>>, vector<51x128xf32>
    %cst = arith.constant dense<0.000000e+00> : vector<8x128xf32>
    %2 = tpu.matmul %0, %1, %cst {dimension_numbers = #tpu.dot_dimension_numbers<[1], [0], [0], [1], [0, 0, 1, 1], [], []>} : vector<8x51xf32>, vector<51x128xf32>, vector<8x128xf32> -> vector<8x128xf32>
    %c0_3 = arith.constant 0 : index
    %c0_4 = arith.constant 0 : index
    %3 = vector.load %arg4[%c0_3, %c0_4] : memref<1x128xf32, #tpu.memory_space<vmem>>, vector<1x128xf32>
    %4 = vector.broadcast %3 : vector<1x128xf32> to vector<8x128xf32>
    %5 = arith.addf %2, %4 : vector<8x128xf32>
    %c0_5 = arith.constant 0 : index
    %c0_6 = arith.constant 0 : index
    %6 = vector.load %arg5[%c0_5, %c0_6] : memref<128x128xf32, #tpu.memory_space<vmem>>, vector<128x128xf32>
    %cst_7 = arith.constant dense<0.000000e+00> : vector<8x128xf32>
    %7 = tpu.matmul %5, %6, %cst_7 {dimension_numbers = #tpu.dot_dimension_numbers<[1], [0], [0], [1], [0, 0, 1, 1], [], []>} : vector<8x128xf32>, vector<128x128xf32>, vector<8x128xf32> -> vector<8x128xf32>
    %c0_8 = arith.constant 0 : index
    %c0_9 = arith.constant 0 : index
    %8 = vector.load %arg6[%c0_8, %c0_9] : memref<1x128xf32, #tpu.memory_space<vmem>>, vector<1x128xf32>
    %9 = vector.broadcast %8 : vector<1x128xf32> to vector<8x128xf32>
    %10 = arith.addf %7, %9 : vector<8x128xf32>
    %cst_10 = arith.constant 0.000000e+00 : f32
    %11 = vector.broadcast %cst_10 : f32 to vector<8x128xf32>
    %12 = arith.cmpf oge, %10, %11 : vector<8x128xf32>
    %c0_11 = arith.constant 0 : index
    %13 = memref.load %arg1[%c0_11] : memref<2xf32, #tpu.memory_space<smem>>
    %14 = vector.broadcast %13 : f32 to vector<8x128xf32>
    %15 = arith.mulf %14, %10 : vector<8x128xf32>
    %16 = arith.select %12, %10, %15 : vector<8x128xi1>, vector<8x128xf32>
    %c0_12 = arith.constant 0 : index
    %c0_13 = arith.constant 0 : index
    %17 = vector.load %arg7[%c0_12, %c0_13] : memref<128x128xf32, #tpu.memory_space<vmem>>, vector<128x128xf32>
    %cst_14 = arith.constant dense<0.000000e+00> : vector<8x128xf32>
    %18 = tpu.matmul %16, %17, %cst_14 {dimension_numbers = #tpu.dot_dimension_numbers<[1], [0], [0], [1], [0, 0, 1, 1], [], []>} : vector<8x128xf32>, vector<128x128xf32>, vector<8x128xf32> -> vector<8x128xf32>
    %c0_15 = arith.constant 0 : index
    %c0_16 = arith.constant 0 : index
    %19 = vector.load %arg8[%c0_15, %c0_16] : memref<1x128xf32, #tpu.memory_space<vmem>>, vector<1x128xf32>
    %20 = vector.broadcast %19 : vector<1x128xf32> to vector<8x128xf32>
    %21 = arith.addf %18, %20 : vector<8x128xf32>
    %cst_17 = arith.constant 0.000000e+00 : f32
    %22 = vector.broadcast %cst_17 : f32 to vector<8x128xf32>
    %23 = arith.cmpf oge, %21, %22 : vector<8x128xf32>
    %c1 = arith.constant 1 : index
    %24 = memref.load %arg1[%c1] : memref<2xf32, #tpu.memory_space<smem>>
    %25 = vector.broadcast %24 : f32 to vector<8x128xf32>
    %26 = arith.mulf %25, %21 : vector<8x128xf32>
    %27 = arith.select %23, %21, %26 : vector<8x128xi1>, vector<8x128xf32>
    %c0_18 = arith.constant 0 : index
    %c0_19 = arith.constant 0 : index
    %28 = vector.load %arg9[%c0_18, %c0_19] : memref<128x50xf32, #tpu.memory_space<vmem>>, vector<128x50xf32>
    %cst_20 = arith.constant dense<0.000000e+00> : vector<8x50xf32>
    %29 = tpu.matmul %27, %28, %cst_20 {dimension_numbers = #tpu.dot_dimension_numbers<[1], [0], [0], [1], [0, 0, 1, 1], [], []>} : vector<8x128xf32>, vector<128x50xf32>, vector<8x50xf32> -> vector<8x50xf32>
    %c0_21 = arith.constant 0 : index
    %c0_22 = arith.constant 0 : index
    %30 = vector.load %arg10[%c0_21, %c0_22] : memref<1x50xf32, #tpu.memory_space<vmem>>, vector<1x50xf32>
    %31 = vector.broadcast %30 : vector<1x50xf32> to vector<8x50xf32>
    %32 = arith.addf %29, %31 : vector<8x50xf32>
    %cst_23 = arith.constant 0.000000e+00 : f32
    %33 = vector.broadcast %cst_23 : f32 to vector<8x50xf32>
    %34 = arith.maximumf %32, %33 : vector<8x50xf32>
    %c0_24 = arith.constant 0 : index
    %c0_25 = arith.constant 0 : index
    %35 = vector.load %arg11[%c0_24, %c0_25] : memref<8x50xf32, #tpu.memory_space<vmem>>, vector<8x50xf32>
    tpu.vector_store %arg11[%c0_24, %c0_25], %34 {strides = array<i32>} : memref<8x50xf32, #tpu.memory_space<vmem>>, vector<8x50xf32>,
    return
  }
  func.func @transform_0(%arg0: i32) -> i32 {
    %c0_i32 = arith.constant 0 : i32
    %c0_i32_0 = arith.constant 0 : i32
    return %c0_i32 : i32
  }
  func.func @transform_1(%arg0: i32) -> (i32, i32) {
    %c0_i32 = arith.constant 0 : i32
    %c0_i32_0 = arith.constant 0 : i32
    return %arg0, %c0_i32 : i32, i32
  }
  func.func @transform_2(%arg0: i32) -> (i32, i32) {
    %c0_i32 = arith.constant 0 : i32
    %c0_i32_0 = arith.constant 0 : i32
    %c0_i32_1 = arith.constant 0 : i32
    return %c0_i32, %c0_i32_0 : i32, i32
  }
  func.func @transform_3(%arg0: i32) -> (i32, i32) {
    %c0_i32 = arith.constant 0 : i32
    %c0_i32_0 = arith.constant 0 : i32
    %c0_i32_1 = arith.constant 0 : i32
    return %c0_i32, %c0_i32_0 : i32, i32
  }
  func.func @transform_4(%arg0: i32) -> (i32, i32) {
    %c0_i32 = arith.constant 0 : i32
    %c0_i32_0 = arith.constant 0 : i32
    %c0_i32_1 = arith.constant 0 : i32
    return %c0_i32, %c0_i32_0 : i32, i32
  }
  func.func @transform_5(%arg0: i32) -> (i32, i32) {
    %c0_i32 = arith.constant 0 : i32
    %c0_i32_0 = arith.constant 0 : i32
    %c0_i32_1 = arith.constant 0 : i32
    return %c0_i32, %c0_i32_0 : i32, i32
  }
  func.func @transform_6(%arg0: i32) -> (i32, i32) {
    %c0_i32 = arith.constant 0 : i32
    %c0_i32_0 = arith.constant 0 : i32
    %c0_i32_1 = arith.constant 0 : i32
    return %c0_i32, %c0_i32_0 : i32, i32
  }
  func.func @transform_7(%arg0: i32) -> (i32, i32) {
    %c0_i32 = arith.constant 0 : i32
    %c0_i32_0 = arith.constant 0 : i32
    %c0_i32_1 = arith.constant 0 : i32
    return %c0_i32, %c0_i32_0 : i32, i32
  }
  func.func @transform_8(%arg0: i32) -> (i32, i32) {
    %c0_i32 = arith.constant 0 : i32
    %c0_i32_0 = arith.constant 0 : i32
    %c0_i32_1 = arith.constant 0 : i32
    return %c0_i32, %c0_i32_0 : i32, i32
  }
  func.func @transform_9(%arg0: i32) -> (i32, i32) {
    %c0_i32 = arith.constant 0 : i32
    %c0_i32_0 = arith.constant 0 : i32
    %c0_i32_1 = arith.constant 0 : i32
    return %c0_i32, %c0_i32_0 : i32, i32
  }
  func.func @transform_10(%arg0: i32) -> (i32, i32) {
    %c0_i32 = arith.constant 0 : i32
    %c0_i32_0 = arith.constant 0 : i32
    return %arg0, %c0_i32 : i32, i32
  }
}

</mosaic_0001>

<llo_original>
// kernel: tpu_custom_call.1
$region0: #{tpu_custom_call.1}
  #allocation0 [shape = 'u32[]', space=smem, size = 0x4, offset = 0x4, fixed_abs, tag = 'smem constant byte address 0x4 - core index']
  #allocation1 [shape = 'u32[144,128]{1,0:T(1,128)}', space=vmem, size = 0x12000, scoped, tag = 'internal scratch']
  %s0 = inlined_call_operand.vmem [shape: f32[2], index: 0, kind: input, shape index: {}]
  %s1 = inlined_call_operand.vmem [shape: f32[8,51], index: 1, kind: input, shape index: {}]
  %s2 = inlined_call_operand.vmem [shape: f32[51,128], index: 2, kind: input, shape index: {}]
  %s3 = inlined_call_operand.vmem [shape: f32[1,128], index: 3, kind: input, shape index: {}]
  %s4 = inlined_call_operand.vmem [shape: f32[128,128], index: 4, kind: input, shape index: {}]
  %s5 = inlined_call_operand.vmem [shape: f32[1,128], index: 5, kind: input, shape index: {}]
  %s6 = inlined_call_operand.hbm [shape: f32[128,128], index: 6, kind: input, shape index: {}]
  %s7 = inlined_call_operand.vmem [shape: f32[1,128], index: 7, kind: input, shape index: {}]
  %s8 = inlined_call_operand.vmem [shape: f32[128,50], index: 8, kind: input, shape index: {}]
  %s9 = inlined_call_operand.vmem [shape: f32[1,50], index: 9, kind: input, shape index: {}]
  %s10 = inlined_call_operand.hbm [shape: f32[8,50], index: 10, kind: output, shape index: {}]
  %s11 = sld [smem:[#allocation0]]
  $region58: #{tpu_custom_call.1} parent=0
    _
  %s13 = ssub.s32 1, %s11
  %s14 = scalar_select 0, %s13, %s11
  $region1: #{tpu_custom_call.1} parent=0
    #allocation2 [shape = 'u8[512]{0}', space=smem, size = 0x200, scoped, tag = 'input window, operand 0, single buffered']
    #allocation3 [shape = 's32[1]{0}', space=sflag, size = 0x4, scoped, tag = 'scoped memory for tpu_custom_call.1']
    #allocation4 [shape = 's32[1]{0}', space=sflag, size = 0x4, scoped, tag = 'scoped memory for tpu_custom_call.1']
    #allocation5 [shape = 's32[1]{0}', space=sflag, size = 0x4, scoped, tag = 'scoped memory for tpu_custom_call.1']
    #allocation6 [shape = 'u8[65536]{0}', space=vmem, size = 0x10000, scoped, tag = 'input window, operand 6, single buffered']
    #allocation7 [shape = 'u8[4096]{0}', space=vmem, size = 0x1000, scoped, tag = 'output window, operand 0, single buffered']
    %15 = vsyncpa [#allocation5], 0
    %16 = vsyncpa [#allocation3], 0
    %17 = vsyncpa [#allocation4], 0
    // Predicated region
    $region2: #{tpu_custom_call.1} parent=1 // pred_check
      _
    $region3: #{tpu_custom_call.1} parent=1 // pred_check_branch
      %19 = sbr.rel (0) target = $region5
    $region4: #{tpu_custom_call.1} parent=1 // pred_region
      %s21 = ssub.s32 16, 16
      %22 = vsyncadd [#allocation5], %s21
      %s24 = sshll.u32 %s0, 4
      %s25 = int_to_ptr.vmem [resolvable:$true] %s24
      %27 = dma.vmem_to_smem %s25, 16, [#allocation2], [#allocation5]
    $region5: #{tpu_custom_call.1} parent=1 // pred_fallthru
      _
    // Predicated region
    $region6: #{tpu_custom_call.1} parent=1 // pred_check
      _
    $region7: #{tpu_custom_call.1} parent=1 // pred_check_branch
      %29 = sbr.rel (0) target = $region9
    $region8: #{tpu_custom_call.1} parent=1 // pred_region
      _
    $region9: #{tpu_custom_call.1} parent=1 // pred_fallthru
      _
    // Predicated region
    $region10: #{tpu_custom_call.1} parent=1 // pred_check
      _
    $region11: #{tpu_custom_call.1} parent=1 // pred_check_branch
      %31 = sbr.rel (0) target = $region13
    $region12: #{tpu_custom_call.1} parent=1 // pred_region
      _
    $region13: #{tpu_custom_call.1} parent=1 // pred_fallthru
      _
    // Predicated region
    $region14: #{tpu_custom_call.1} parent=1 // pred_check
      _
    $region15: #{tpu_custom_call.1} parent=1 // pred_check_branch
      %33 = sbr.rel (0) target = $region17
    $region16: #{tpu_custom_call.1} parent=1 // pred_region
      _
    $region17: #{tpu_custom_call.1} parent=1 // pred_fallthru
      _
    // Predicated region
    $region18: #{tpu_custom_call.1} parent=1 // pred_check
      _
    $region19: #{tpu_custom_call.1} parent=1 // pred_check_branch
      %35 = sbr.rel (0) target = $region21
    $region20: #{tpu_custom_call.1} parent=1 // pred_region
      _
    $region21: #{tpu_custom_call.1} parent=1 // pred_fallthru
      _
    // Predicated region
    $region22: #{tpu_custom_call.1} parent=1 // pred_check
      _
    $region23: #{tpu_custom_call.1} parent=1 // pred_check_branch
      %37 = sbr.rel (0) target = $region25
    $region24: #{tpu_custom_call.1} parent=1 // pred_region
      _
    $region25: #{tpu_custom_call.1} parent=1 // pred_fallthru
      _
    // Predicated region
    $region26: #{tpu_custom_call.1} parent=1 // pred_check
      _
    $region27: #{tpu_custom_call.1} parent=1 // pred_check_branch
      %39 = sbr.rel (0) target = $region29
    $region28: #{tpu_custom_call.1} parent=1 // pred_region
      %s41 = ssub.s32 2048, 2048
      %42 = vsyncadd [#allocation3], %s41
      %s43 = sshll.u32 [#allocation6], 4
      %s44 = int_to_ptr.vmem [resolvable:$true] %s43
      %49 = dma.hbm_to_vmem [thread:$0]  %s6, 2048, %s44, [#allocation3], 128, 128, 8
    $region29: #{tpu_custom_call.1} parent=1 // pred_fallthru
      _
    // Predicated region
    $region30: #{tpu_custom_call.1} parent=1 // pred_check
      _
    $region31: #{tpu_custom_call.1} parent=1 // pred_check_branch
      %51 = sbr.rel (0) target = $region33
    $region32: #{tpu_custom_call.1} parent=1 // pred_region
      _
    $region33: #{tpu_custom_call.1} parent=1 // pred_fallthru
      _
    // Predicated region
    $region34: #{tpu_custom_call.1} parent=1 // pred_check
      _
    $region35: #{tpu_custom_call.1} parent=1 // pred_check_branch
      %53 = sbr.rel (0) target = $region37
    $region36: #{tpu_custom_call.1} parent=1 // pred_region
      _
    $region37: #{tpu_custom_call.1} parent=1 // pred_fallthru
      _
    // Predicated region
    $region38: #{tpu_custom_call.1} parent=1 // pred_check
      _
    $region39: #{tpu_custom_call.1} parent=1 // pred_check_branch
      %55 = sbr.rel (0) target = $region41
    $region40: #{tpu_custom_call.1} parent=1 // pred_region
      _
    $region41: #{tpu_custom_call.1} parent=1 // pred_fallthru
      _
    // Predicated region
    $region42: #{tpu_custom_call.1} parent=1 // pred_check
      _
    $region43: #{tpu_custom_call.1} parent=1 // pred_check_branch
      %57 = sbr.rel (0) target = $region45
    $region44: #{tpu_custom_call.1} parent=1 // pred_region
      %58 = dma.done [#allocation5], 16
    $region45: #{tpu_custom_call.1} parent=1 // pred_fallthru
      _
    // Predicated region
    $region46: #{tpu_custom_call.1} parent=1 // pred_check
      _
    $region47: #{tpu_custom_call.1} parent=1 // pred_check_branch
      %60 = sbr.rel (0) target = $region49
    $region48: #{tpu_custom_call.1} parent=1 // pred_region
      %61 = dma.done [#allocation3], 2048
    $region49: #{tpu_custom_call.1} parent=1 // pred_fallthru
      _
    %62 = sfence
    %v63 = vld [vmem:[%s1] sm:$0xff]
    %v64 = vld [vmem:[%s2] sm:$0xff]
    %v65 = vld [vmem:[%s2 + $0x8] sm:$0xff]
    %v66 = vld [vmem:[%s2 + $0x10] sm:$0xff]
    %v67 = vld [vmem:[%s2 + $0x18] sm:$0xff]
    %v68 = vld [vmem:[%s2 + $0x20] sm:$0xff]
    %v69 = vld [vmem:[%s2 + $0x28] sm:$0xff]
    %v70 = vld [vmem:[%s2 + $0x30] sm:$0x7]
    %v71 = vld [vmem:[%s3] sm:$0x1]
    %v73 = vlaneseq
    %v74 = vshrl.u32 %v73, 7
    %v75 = vsub.s32 0, %v74
    %v76 = vrot.slane %v71, %v75
    %vm78 = vcmask 416768
    %v80 = vsel %vm78, %v63, 0
    %vm82 = vcmask 1042432
    %v84 = vsel %vm82, %v70, 0
    %86 = vmatprep.subr.mxu0 0.0
    %87 = vmatpush1.msra.mxu0 %v64
    %88 = vmatprep.subr.mxu0 0.0
    %89 = vmatpush1.msra.mxu0 %v65
    %90 = vmatprep.subr.mxu0 0.0
    %91 = vmatpush1.msra.mxu0 %v66
    %92 = vmatprep.subr.mxu0 0.0
    %93 = vmatpush1.msra.mxu0 %v67
    %94 = vmatprep.subr.mxu0 0.0
    %95 = vmatpush1.msra.mxu0 %v68
    %96 = vmatprep.subr.mxu0 0.0
    %97 = vmatpush1.msra.mxu0 %v69
    %98 = vmatprep.subr.mxu0 0.0
    %99 = vmatpush1.msra.mxu0 %v84
    %100 = vmatprep.subr.mxu0 0.0
    %101 = vmatpush1.msra.mxu0 0.0
    %102 = vmatprep.subr.mxu0 0.0
    %103 = vmatpush1.msra.mxu0 0.0
    %104 = vmatprep.subr.mxu0 0.0
    %105 = vmatpush1.msra.mxu0 0.0
    %106 = vmatprep.subr.mxu0 0.0
    %107 = vmatpush1.msra.mxu0 0.0
    %108 = vmatprep.subr.mxu0 0.0
    %109 = vmatpush1.msra.mxu0 0.0
    %110 = vmatprep.subr.mxu0 0.0
    %111 = vmatpush1.msra.mxu0 0.0
    %112 = vmatprep.subr.mxu0 0.0
    %113 = vmatpush1.msra.mxu0 0.0
    %114 = vmatprep.subr.mxu0 0.0
    %115 = vmatpush1.msra.mxu0 0.0
    %116 = vmatprep.subr.mxu0 0.0
    %117 = vmatpush1.msra.mxu0 0.0
    %118 = vmatprep.subr.mxu0 0.0
    %119 = vmatpush1.msra.mxu0 0.0
    %120 = vmatprep.subr.mxu0 0.0
    %121 = vmatpush1.msra.mxu0 0.0
    %122 = vmatprep.subr.mxu0 0.0
    %123 = vmatpush1.msra.mxu0 0.0
    %124 = vmatprep.subr.mxu0 0.0
    %125 = vmatpush1.msra.mxu0 0.0
    %126 = vmatprep.subr.mxu0 0.0
    %127 = vmatpush1.msra.mxu0 0.0
    %128 = vmatprep.subr.mxu0 0.0
    %129 = vmatpush1.msra.mxu0 0.0
    %130 = vmatprep.subr.mxu0 0.0
    %131 = vmatpush1.msra.mxu0 0.0
    %132 = vmatprep.subr.mxu0 0.0
    %133 = vmatpush1.msra.mxu0 0.0
    %134 = vmatprep.subr.mxu0 0.0
    %135 = vmatpush1.msra.mxu0 0.0
    %136 = vmatprep.subr.mxu0 0.0
    %137 = vmatpush1.msra.mxu0 0.0
    %138 = vmatprep.subr.mxu0 0.0
    %139 = vmatpush1.msra.mxu0 0.0
    %140 = vmatprep.subr.mxu0 0.0
    %141 = vmatpush1.msra.mxu0 0.0
    %142 = vmatprep.subr.mxu0 0.0
    %143 = vmatpush1.msra.mxu0 0.0
    %144 = vmatprep.subr.mxu0 0.0
    %145 = vmatpush1.msra.mxu0 0.0
    %146 = vmatprep.subr.mxu0 0.0
    %147 = vmatpush1.msra.mxu0 0.0
    %148 = vmatprep.subr.mxu0 0.0
    %149 = vmatpush1.msra.mxu0 0.0
    %150 = vmatprep.mubr.f32.mxu0 0.0
    %151 = vmatmul.mubr.f32.gmra.mrb[0].mxu0 %v80
    %v152 = vpop.f32.mrb[0].mxu0
    %v153 = vadd.f32 %v76, %v152
    %v154 = vpop.f32.mrb[0].mxu0
    %155 = vdwg.mxu0
    %v156 = vld [vmem:[%s4] sm:$0xff]
    %v157 = vld [vmem:[%s4 + $0x8] sm:$0xff]
    %v158 = vld [vmem:[%s4 + $0x10] sm:$0xff]
    %v159 = vld [vmem:[%s4 + $0x18] sm:$0xff]
    %v160 = vld [vmem:[%s4 + $0x20] sm:$0xff]
    %v161 = vld [vmem:[%s4 + $0x28] sm:$0xff]
    %v162 = vld [vmem:[%s4 + $0x30] sm:$0xff]
    %v163 = vld [vmem:[%s4 + $0x38] sm:$0xff]
    %v164 = vld [vmem:[%s4 + $0x40] sm:$0xff]
    %v165 = vld [vmem:[%s4 + $0x48] sm:$0xff]
    %v166 = vld [vmem:[%s4 + $0x50] sm:$0xff]
    %v167 = vld [vmem:[%s4 + $0x58] sm:$0xff]
    %v168 = vld [vmem:[%s4 + $0x60] sm:$0xff]
    %v169 = vld [vmem:[%s4 + $0x68] sm:$0xff]
    %v170 = vld [vmem:[%s4 + $0x70] sm:$0xff]
    %v171 = vld [vmem:[%s4 + $0x78] sm:$0xff]
    %v172 = vld [vmem:[%s5] sm:$0x1]
    %v174 = vlaneseq
    %v175 = vshrl.u32 %v174, 7
    %v176 = vsub.s32 0, %v175
    %v177 = vrot.slane %v172, %v176
    %179 = vmatprep.subr.mxu0 0.0
    %180 = vmatpush1.msra.mxu0 %v156
    %181 = vmatprep.subr.mxu0 0.0
    %182 = vmatpush1.msra.mxu0 %v157
    %183 = vmatprep.subr.mxu0 0.0
    %184 = vmatpush1.msra.mxu0 %v158
    %185 = vmatprep.subr.mxu0 0.0
    %186 = vmatpush1.msra.mxu0 %v159
    %187 = vmatprep.subr.mxu0 0.0
    %188 = vmatpush1.msra.mxu0 %v160
    %189 = vmatprep.subr.mxu0 0.0
    %190 = vmatpush1.msra.mxu0 %v161
    %191 = vmatprep.subr.mxu0 0.0
    %192 = vmatpush1.msra.mxu0 %v162
    %193 = vmatprep.subr.mxu0 0.0
    %194 = vmatpush1.msra.mxu0 %v163
    %195 = vmatprep.subr.mxu0 0.0
    %196 = vmatpush1.msra.mxu0 %v164
    %197 = vmatprep.subr.mxu0 0.0
    %198 = vmatpush1.msra.mxu0 %v165
    %199 = vmatprep.subr.mxu0 0.0
    %200 = vmatpush1.msra.mxu0 %v166
    %201 = vmatprep.subr.mxu0 0.0
    %202 = vmatpush1.msra.mxu0 %v167
    %203 = vmatprep.subr.mxu0 0.0
    %204 = vmatpush1.msra.mxu0 %v168
    %205 = vmatprep.subr.mxu0 0.0
    %206 = vmatpush1.msra.mxu0 %v169
    %207 = vmatprep.subr.mxu0 0.0
    %208 = vmatpush1.msra.mxu0 %v170
    %209 = vmatprep.subr.mxu0 0.0
    %210 = vmatpush1.msra.mxu0 %v171
    %211 = vmatprep.subr.mxu0 0.0
    %212 = vmatpush1.msra.mxu0 0.0
    %213 = vmatprep.subr.mxu0 0.0
    %214 = vmatpush1.msra.mxu0 0.0
    %215 = vmatprep.subr.mxu0 0.0
    %216 = vmatpush1.msra.mxu0 0.0
    %217 = vmatprep.subr.mxu0 0.0
    %218 = vmatpush1.msra.mxu0 0.0
    %219 = vmatprep.subr.mxu0 0.0
    %220 = vmatpush1.msra.mxu0 0.0
    %221 = vmatprep.subr.mxu0 0.0
    %222 = vmatpush1.msra.mxu0 0.0
    %223 = vmatprep.subr.mxu0 0.0
    %224 = vmatpush1.msra.mxu0 0.0
    %225 = vmatprep.subr.mxu0 0.0
    %226 = vmatpush1.msra.mxu0 0.0
    %227 = vmatprep.subr.mxu0 0.0
    %228 = vmatpush1.msra.mxu0 0.0
    %229 = vmatprep.subr.mxu0 0.0
    %230 = vmatpush1.msra.mxu0 0.0
    %231 = vmatprep.subr.mxu0 0.0
    %232 = vmatpush1.msra.mxu0 0.0
    %233 = vmatprep.subr.mxu0 0.0
    %234 = vmatpush1.msra.mxu0 0.0
    %235 = vmatprep.subr.mxu0 0.0
    %236 = vmatpush1.msra.mxu0 0.0
    %237 = vmatprep.subr.mxu0 0.0
    %238 = vmatpush1.msra.mxu0 0.0
    %239 = vmatprep.subr.mxu0 0.0
    %240 = vmatpush1.msra.mxu0 0.0
    %241 = vmatprep.subr.mxu0 0.0
    %242 = vmatpush1.msra.mxu0 0.0
    %243 = vmatprep.mubr.f32.mxu0 0.0
    %244 = vmatmul.mubr.f32.gmra.mrb[0].mxu0 %v153
    %v245 = vpop.f32.mrb[0].mxu0
    %v246 = vadd.f32 %v177, %v245
    %v247 = vpop.f32.mrb[0].mxu0
    %248 = vdwg.mxu0
    %vm249 = vcmp.ge.f32.partialorder %v246, 0.0
    %s250 = sld [smem:[#allocation2]]
    %v251 = vstv %s250
    %v252 = vmul.f32 %v251, %v246
    %v253 = vsel %vm249, %v246, %v252
    %v254 = vld [vmem:[#allocation6] sm:$0xff]
    %v255 = vld [vmem:[#allocation6 + $0x8] sm:$0xff]
    %v256 = vld [vmem:[#allocation6 + $0x10] sm:$0xff]
    %v257 = vld [vmem:[#allocation6 + $0x18] sm:$0xff]
    %v258 = vld [vmem:[#allocation6 + $0x20] sm:$0xff]
    %v259 = vld [vmem:[#allocation6 + $0x28] sm:$0xff]
    %v260 = vld [vmem:[#allocation6 + $0x30] sm:$0xff]
    %v261 = vld [vmem:[#allocation6 + $0x38] sm:$0xff]
    %v262 = vld [vmem:[#allocation6 + $0x40] sm:$0xff]
    %v263 = vld [vmem:[#allocation6 + $0x48] sm:$0xff]
    %v264 = vld [vmem:[#allocation6 + $0x50] sm:$0xff]
    %v265 = vld [vmem:[#allocation6 + $0x58] sm:$0xff]
    %v266 = vld [vmem:[#allocation6 + $0x60] sm:$0xff]
    %v267 = vld [vmem:[#allocation6 + $0x68] sm:$0xff]
    %v268 = vld [vmem:[#allocation6 + $0x70] sm:$0xff]
    %v269 = vld [vmem:[#allocation6 + $0x78] sm:$0xff]
    %v270 = vld [vmem:[%s7] sm:$0x1]
    %v272 = vlaneseq
    %v273 = vshrl.u32 %v272, 7
    %v274 = vsub.s32 0, %v273
    %v275 = vrot.slane %v270, %v274
    %277 = vmatprep.subr.mxu0 0.0
    %278 = vmatpush1.msra.mxu0 %v254
    %279 = vmatprep.subr.mxu0 0.0
    %280 = vmatpush1.msra.mxu0 %v255
    %281 = vmatprep.subr.mxu0 0.0
    %282 = vmatpush1.msra.mxu0 %v256
    %283 = vmatprep.subr.mxu0 0.0
    %284 = vmatpush1.msra.mxu0 %v257
    %285 = vmatprep.subr.mxu0 0.0
    %286 = vmatpush1.msra.mxu0 %v258
    %287 = vmatprep.subr.mxu0 0.0
    %288 = vmatpush1.msra.mxu0 %v259
    %289 = vmatprep.subr.mxu0 0.0
    %290 = vmatpush1.msra.mxu0 %v260
    %291 = vmatprep.subr.mxu0 0.0
    %292 = vmatpush1.msra.mxu0 %v261
    %293 = vmatprep.subr.mxu0 0.0
    %294 = vmatpush1.msra.mxu0 %v262
    %295 = vmatprep.subr.mxu0 0.0
    %296 = vmatpush1.msra.mxu0 %v263
    %297 = vmatprep.subr.mxu0 0.0
    %298 = vmatpush1.msra.mxu0 %v264
    %299 = vmatprep.subr.mxu0 0.0
    %300 = vmatpush1.msra.mxu0 %v265
    %301 = vmatprep.subr.mxu0 0.0
    %302 = vmatpush1.msra.mxu0 %v266
    %303 = vmatprep.subr.mxu0 0.0
    %304 = vmatpush1.msra.mxu0 %v267
    %305 = vmatprep.subr.mxu0 0.0
    %306 = vmatpush1.msra.mxu0 %v268
    %307 = vmatprep.subr.mxu0 0.0
    %308 = vmatpush1.msra.mxu0 %v269
    %309 = vmatprep.subr.mxu0 0.0
    %310 = vmatpush1.msra.mxu0 0.0
    %311 = vmatprep.subr.mxu0 0.0
    %312 = vmatpush1.msra.mxu0 0.0
    %313 = vmatprep.subr.mxu0 0.0
    %314 = vmatpush1.msra.mxu0 0.0
    %315 = vmatprep.subr.mxu0 0.0
    %316 = vmatpush1.msra.mxu0 0.0
    %317 = vmatprep.subr.mxu0 0.0
    %318 = vmatpush1.msra.mxu0 0.0
    %319 = vmatprep.subr.mxu0 0.0
    %320 = vmatpush1.msra.mxu0 0.0
    %321 = vmatprep.subr.mxu0 0.0
    %322 = vmatpush1.msra.mxu0 0.0
    %323 = vmatprep.subr.mxu0 0.0
    %324 = vmatpush1.msra.mxu0 0.0
    %325 = vmatprep.subr.mxu0 0.0
    %326 = vmatpush1.msra.mxu0 0.0
    %327 = vmatprep.subr.mxu0 0.0
    %328 = vmatpush1.msra.mxu0 0.0
    %329 = vmatprep.subr.mxu0 0.0
    %330 = vmatpush1.msra.mxu0 0.0
    %331 = vmatprep.subr.mxu0 0.0
    %332 = vmatpush1.msra.mxu0 0.0
    %333 = vmatprep.subr.mxu0 0.0
    %334 = vmatpush1.msra.mxu0 0.0
    %335 = vmatprep.subr.mxu0 0.0
    %336 = vmatpush1.msra.mxu0 0.0
    %337 = vmatprep.subr.mxu0 0.0
    %338 = vmatpush1.msra.mxu0 0.0
    %339 = vmatprep.subr.mxu0 0.0
    %340 = vmatpush1.msra.mxu0 0.0
    %341 = vmatprep.mubr.f32.mxu0 0.0
    %342 = vmatmul.mubr.f32.gmra.mrb[0].mxu0 %v253
    %v343 = vpop.f32.mrb[0].mxu0
    %v344 = vadd.f32 %v275, %v343
    %v345 = vpop.f32.mrb[0].mxu0
    %346 = vdwg.mxu0
    %vm347 = vcmp.ge.f32.partialorder %v344, 0.0
    %s348 = sld [smem:[#allocation2 + $0x1]]
    %v349 = vstv %s348
    %v350 = vmul.f32 %v349, %v344
    %v351 = vsel %vm347, %v344, %v350
    %v352 = vld [vmem:[%s8] sm:$0xff]
    %v353 = vld [vmem:[%s8 + $0x8] sm:$0xff]
    %v354 = vld [vmem:[%s8 + $0x10] sm:$0xff]
    %v355 = vld [vmem:[%s8 + $0x18] sm:$0xff]
    %v356 = vld [vmem:[%s8 + $0x20] sm:$0xff]
    %v357 = vld [vmem:[%s8 + $0x28] sm:$0xff]
    %v358 = vld [vmem:[%s8 + $0x30] sm:$0xff]
    %v359 = vld [vmem:[%s8 + $0x38] sm:$0xff]
    %v360 = vld [vmem:[%s8 + $0x40] sm:$0xff]
    %v361 = vld [vmem:[%s8 + $0x48] sm:$0xff]
    %v362 = vld [vmem:[%s8 + $0x50] sm:$0xff]
    %v363 = vld [vmem:[%s8 + $0x58] sm:$0xff]
    %v364 = vld [vmem:[%s8 + $0x60] sm:$0xff]
    %v365 = vld [vmem:[%s8 + $0x68] sm:$0xff]
    %v366 = vld [vmem:[%s8 + $0x70] sm:$0xff]
    %v367 = vld [vmem:[%s8 + $0x78] sm:$0xff]
    %v368 = vld [vmem:[%s9] sm:$0x1]
    %v370 = vlaneseq
    %v371 = vshrl.u32 %v370, 7
    %v372 = vsub.s32 0, %v371
    %v373 = vrot.slane %v368, %v372
    %375 = vmatprep.subr.mxu0 0.0
    %376 = vmatpush1.msra.mxu0 %v352
    %377 = vmatprep.subr.mxu0 0.0
    %378 = vmatpush1.msra.mxu0 %v353
    %379 = vmatprep.subr.mxu0 0.0
    %380 = vmatpush1.msra.mxu0 %v354
    %381 = vmatprep.subr.mxu0 0.0
    %382 = vmatpush1.msra.mxu0 %v355
    %383 = vmatprep.subr.mxu0 0.0
    %384 = vmatpush1.msra.mxu0 %v356
    %385 = vmatprep.subr.mxu0 0.0
    %386 = vmatpush1.msra.mxu0 %v357
    %387 = vmatprep.subr.mxu0 0.0
    %388 = vmatpush1.msra.mxu0 %v358
    %389 = vmatprep.subr.mxu0 0.0
    %390 = vmatpush1.msra.mxu0 %v359
    %391 = vmatprep.subr.mxu0 0.0
    %392 = vmatpush1.msra.mxu0 %v360
    %393 = vmatprep.subr.mxu0 0.0
    %394 = vmatpush1.msra.mxu0 %v361
    %395 = vmatprep.subr.mxu0 0.0
    %396 = vmatpush1.msra.mxu0 %v362
    %397 = vmatprep.subr.mxu0 0.0
    %398 = vmatpush1.msra.mxu0 %v363
    %399 = vmatprep.subr.mxu0 0.0
    %400 = vmatpush1.msra.mxu0 %v364
    %401 = vmatprep.subr.mxu0 0.0
    %402 = vmatpush1.msra.mxu0 %v365
    %403 = vmatprep.subr.mxu0 0.0
    %404 = vmatpush1.msra.mxu0 %v366
    %405 = vmatprep.subr.mxu0 0.0
    %406 = vmatpush1.msra.mxu0 %v367
    %407 = vmatprep.subr.mxu0 0.0
    %408 = vmatpush1.msra.mxu0 0.0
    %409 = vmatprep.subr.mxu0 0.0
    %410 = vmatpush1.msra.mxu0 0.0
    %411 = vmatprep.subr.mxu0 0.0
    %412 = vmatpush1.msra.mxu0 0.0
    %413 = vmatprep.subr.mxu0 0.0
    %414 = vmatpush1.msra.mxu0 0.0
    %415 = vmatprep.subr.mxu0 0.0
    %416 = vmatpush1.msra.mxu0 0.0
    %417 = vmatprep.subr.mxu0 0.0
    %418 = vmatpush1.msra.mxu0 0.0
    %419 = vmatprep.subr.mxu0 0.0
    %420 = vmatpush1.msra.mxu0 0.0
    %421 = vmatprep.subr.mxu0 0.0
    %422 = vmatpush1.msra.mxu0 0.0
    %423 = vmatprep.subr.mxu0 0.0
    %424 = vmatpush1.msra.mxu0 0.0
    %425 = vmatprep.subr.mxu0 0.0
    %426 = vmatpush1.msra.mxu0 0.0
    %427 = vmatprep.subr.mxu0 0.0
    %428 = vmatpush1.msra.mxu0 0.0
    %429 = vmatprep.subr.mxu0 0.0
    %430 = vmatpush1.msra.mxu0 0.0
    %431 = vmatprep.subr.mxu0 0.0
    %432 = vmatpush1.msra.mxu0 0.0
    %433 = vmatprep.subr.mxu0 0.0
    %434 = vmatpush1.msra.mxu0 0.0
    %435 = vmatprep.subr.mxu0 0.0
    %436 = vmatpush1.msra.mxu0 0.0
    %437 = vmatprep.subr.mxu0 0.0
    %438 = vmatpush1.msra.mxu0 0.0
    %439 = vmatprep.mubr.f32.mxu0 0.0
    %440 = vmatmul.mubr.f32.gmra.mrb[0].mxu0 %v351
    %v441 = vpop.f32.mrb[0].mxu0
    %v442 = vadd.f32 %v373, %v441
    %v443 = vpop.f32.mrb[0].mxu0
    %444 = vdwg.mxu0
    %v445 = vmax.f32 %v442, 0.0
    %vm446 = vcmask 408576
    %447 = vst.msk [vmem:[#allocation7] sm:$0xff] %vm446, %v445
    // Predicated region
    $region50: #{tpu_custom_call.1} parent=1 // pred_check
      _
    $region51: #{tpu_custom_call.1} parent=1 // pred_check_branch
      %449 = sbr.rel (0) target = $region53
    $region52: #{tpu_custom_call.1} parent=1 // pred_region
      %s451 = ssub.s32 128, 128
      %452 = vsyncadd [#allocation4], %s451
      %s454 = sshll.u32 [#allocation7], 4
      %s455 = int_to_ptr.vmem [resolvable:$true] %s454
      %457 = dma.vmem_to_hbm [thread:$0]  %s455, 128, %s10, [#allocation4]
    $region53: #{tpu_custom_call.1} parent=1 // pred_fallthru
      _
    // Predicated region
    $region54: #{tpu_custom_call.1} parent=1 // pred_check
      _
    $region55: #{tpu_custom_call.1} parent=1 // pred_check_branch
      %459 = sbr.rel (0) target = $region57
    $region56: #{tpu_custom_call.1} parent=1 // pred_region
      %460 = dma.done [#allocation4], 128
    $region57: #{tpu_custom_call.1} parent=1 // pred_fallthru
      _
    %461 = vsyncpa [#allocation3], 1
    %462 = vsyncpa [#allocation4], 1
    %463 = vsyncpa [#allocation5], 1

</llo_original>
